<compile_context>
chip_gen: v7x
topology: tpu7x:2x2x1
jax: 0.10.0
libtpu: 0.0.40
codegen_flags: <defaults>
</compile_context>

<pallas_src>
import jax
import jax.numpy as jnp
from jax.experimental import pallas as pl
from jax.experimental.pallas import tpu as pltpu

_BYPASS_BYTES = 128 * 1024          # below this, a kernel launch is pure overhead
_MIN_CHUNK_BYTES = 2 * 1024 * 1024  # each in-flight DMA moves at least ~2 MiB
_MAX_DMA_CHUNKS = 4                 # at most 4 DMAs in flight
_SUB = 8                            # keep chunk row boundaries sublane-aligned


def _as_2d(x):
    """Cheap (metadata-only) 2D view used to carve the copy into row chunks."""
    n = x.size
    for width in (1024, 512, 256, 128):
        if n % width == 0:
            return x.reshape(n // width, width)
    if x.ndim >= 2:
        return x.reshape(-1, x.shape[-1])
    return x.reshape(1, n)


def _row_bounds(rows, cols, itemsize):
    """Static chunk boundaries along the row axis (inclusive/exclusive pairs)."""
    nbytes = rows * cols * itemsize
    n_chunks = int(min(_MAX_DMA_CHUNKS, max(1, nbytes // _MIN_CHUNK_BYTES)))
    rows_per = (rows // n_chunks) // _SUB * _SUB
    if n_chunks == 1 or rows_per == 0:
        return (0, rows)
    return tuple(i * rows_per for i in range(n_chunks)) + (rows,)


def _make_identity_dma_kernel(bounds, rows):
    """Kernel factory: direct HBM->HBM DMA over (up to 4) static row chunks."""
    n_chunks = len(bounds) - 1

    def _chunk_view(ref, lo, hi):
        if lo == 0 and hi == rows:
            return ref                       # whole-array copy, no slicing needed
        return ref.at[pl.ds(lo, hi - lo), :]  # static row-chunk view

    def kernel(x_hbm, o_hbm, sems):
        copies = []
        for c in range(n_chunks):
            lo, hi = bounds[c], bounds[c + 1]
            cp = pltpu.make_async_copy(
                _chunk_view(x_hbm, lo, hi),
                _chunk_view(o_hbm, lo, hi),
                sems.at[c],
            )
            cp.start()                        # issue all chunk DMAs first
            copies.append(cp)
        for cp in copies:                     # then wait for all of them
            cp.wait()

    return kernel


def identity_pallas(x):
    """Identity forward pass implemented as a Pallas TPU kernel."""
    orig_shape = x.shape
    itemsize = jnp.dtype(x.dtype).itemsize
    nbytes = x.size * itemsize

    # Small-size (and empty) bypass: returning the input IS the identity.
    if x.size == 0 or nbytes <= _BYPASS_BYTES:
        return x

    x2d = _as_2d(x)
    rows, cols = x2d.shape
    bounds = _row_bounds(rows, cols, itemsize)
    n_chunks = len(bounds) - 1

    out2d = pl.pallas_call(
        _make_identity_dma_kernel(bounds, rows),
        out_shape=jax.ShapeDtypeStruct((rows, cols), x2d.dtype),
        in_specs=[pl.BlockSpec(memory_space=pl.ANY)],   # stay in HBM
        out_specs=pl.BlockSpec(memory_space=pl.ANY),    # stay in HBM
        scratch_shapes=[pltpu.SemaphoreType.DMA((n_chunks,))],
        cost_estimate=pl.CostEstimate(
            flops=0, transcendentals=0, bytes_accessed=2 * nbytes
        ),
    )(x2d)

    return out2d.reshape(orig_shape)


if __name__ == "__main__":
    key = jax.random.PRNGKey(0)
    k1, k2, k3, k4 = jax.random.split(key, 4)

    # Small NCHW-style input consistent with typical AtlasNet usage
    # (goes through the small-size bypass).
    x_small = jax.random.normal(k1, (2, 4, 16, 16), dtype=jnp.float32)
    # Medium input: exercises the single-DMA kernel path (512 KiB).
    x_med = jax.random.normal(k2, (4, 8, 64, 64), dtype=jnp.float32)
    # Larger input: exercises the multi-chunk (multiple in-flight DMA) path (4 MiB).
    x_big = jax.random.normal(k3, (8, 8, 128, 128), dtype=jnp.float32)
    # Odd, non-128-divisible shape: exercises the general-shape path (~570 KiB).
    x_odd = jax.random.normal(k4, (321, 7, 65), dtype=jnp.float32)

    for x in (x_small, x_med, x_big, x_odd):
        y = identity_pallas(x)
        jax.block_until_ready(y)
        assert y.shape == x.shape, f"shape mismatch: {y.shape} vs {x.shape}"
        assert y.dtype == x.dtype, f"dtype mismatch: {y.dtype} vs {x.dtype}"
        assert bool(jnp.all(y == x)), "identity output does not match input"

    print("KERNEL_OK")
</pallas_src>

<mosaic_0001>
module attributes {stable_mosaic.version = 11 : i64} {
  func.func @kernel(%arg0: memref<128x1024xf32, #tpu.memory_space<any>>, %arg1: memref<128x1024xf32, #tpu.memory_space<any>>, %arg2: memref<1x!tpu.dma_semaphore, #tpu.memory_space<semaphore_mem>>) attributes {dimension_semantics = [], scalar_prefetch = 0 : i64, scratch_operands = 1 : i64, tpu.core_type = #tpu.core_type<tc>} {
    %c0_i32 = arith.constant 0 : i32
    %0 = tpu.memref_slice %arg2[%c0_i32] : memref<1x!tpu.dma_semaphore, #tpu.memory_space<semaphore_mem>> -> memref<1x!tpu.dma_semaphore, #tpu.memory_space<semaphore_mem>>
    %1 = tpu.memref_squeeze %0 : memref<1x!tpu.dma_semaphore, #tpu.memory_space<semaphore_mem>> -> memref<!tpu.dma_semaphore, #tpu.memory_space<semaphore_mem>>
    tpu.enqueue_dma source(%arg0 : memref<128x1024xf32, #tpu.memory_space<any>>) target(%arg1 : memref<128x1024xf32, #tpu.memory_space<any>>) target_semaphore(%1 : memref<!tpu.dma_semaphore, #tpu.memory_space<semaphore_mem>>)
    %c0_i32_0 = arith.constant 0 : i32
    %2 = tpu.memref_slice %arg2[%c0_i32_0] : memref<1x!tpu.dma_semaphore, #tpu.memory_space<semaphore_mem>> -> memref<1x!tpu.dma_semaphore, #tpu.memory_space<semaphore_mem>>
    %3 = tpu.memref_squeeze %2 : memref<1x!tpu.dma_semaphore, #tpu.memory_space<semaphore_mem>> -> memref<!tpu.dma_semaphore, #tpu.memory_space<semaphore_mem>>
    tpu.wait_dma2 semaphore(%3 : memref<!tpu.dma_semaphore, #tpu.memory_space<semaphore_mem>>) src(%arg0 : memref<128x1024xf32, #tpu.memory_space<any>>) dst(%arg1 : memref<128x1024xf32, #tpu.memory_space<any>>)
    return
  }
}

</mosaic_0001>

<llo_original>
// kernel: tpu_custom_call.1
$region0: #{tpu_custom_call.1}
  #allocation0 [shape = 'u32[]', space=smem, size = 0x4, offset = 0x4, fixed_abs, tag = 'smem constant byte address 0x4 - core index']
  #allocation1 [shape = 'u32[144,128]{1,0:T(1,128)}', space=vmem, size = 0x12000, scoped, tag = 'internal scratch']
  #allocation2 [shape = 's32[1]{0}', space=sflag, size = 0x4, scoped, tag = 'scratch operand']
  #allocation3 [shape = 's32[]', space=sflag, size = 0x4, offset = 0, fixed_abs, tag = 'sflag constant byte address 0x0 - dummy sync flag']
  #allocation4 [shape = 'u32[0]{0}', space=smem, size = 0, offset = 0, fixed_abs, tag = 'smem constant byte address 0x0 - null']
  %s0 = inlined_call_operand.hbm [shape: f32[128,1024], index: 0, kind: input, shape index: {}]
  %s1 = inlined_call_operand.hbm [shape: f32[128,1024], index: 1, kind: output, shape index: {}]
  %s2 = sld [smem:[#allocation0]]
  $region2: #{tpu_custom_call.1} parent=0
    _
  %s4 = ssub.s32 1, %s2
  %s5 = scalar_select 0, %s4, %s2
  %s7 = sshll.u32 1, 14
  %s8 = sxor.u32 4294967295, %s7
  %s11 = sshll.u32 3, 24
  %s12 = sxor.u32 4294967295, %s11
  %s13 = sand.u32 0, %s12
  %s15 = sor.u32 %s13, 0
  %18 = dma.general %s0, 16384, %s1, [#allocation2], [#allocation3], [#allocation4], %s15, 0
  %s19 = smul.u32 8, 16
  %s20 = smul.u32 %s19, 8
  %s21 = sshll.u32 %s20, 4
  %22 = dma.done [#allocation2], %s21
  %23 = vsyncmov [#allocation2]
  %s24 = vpop.sfrf %23
  %p25 = scmp.eq.s32.totalorder %s24, 0
  %p26 = pneg %p25
  %28 = shalt.err (%p26)

</llo_original>
